<compile_context>
chip_gen: v6e
topology: v6e:2x2x1
jax: 0.10.0
libtpu: 0.0.40
codegen_flags: <defaults>
</compile_context>

<pallas_src>
import jax
import jax.numpy as jnp
from jax.experimental import pallas as pl
from jax.experimental.pallas import tpu as pltpu

EPS = 1e-7       # module eps
LN_EPS = 1e-5    # LayerNorm eps


# --------------------------------------------------------------------------- #
# Kernel
# --------------------------------------------------------------------------- #
def _in_mlp_kernel(x_ref, w1_ref, w2_ref, vh_ref, vc_ref, out_ref):
    """x_ref/out_ref: (Bt, C, HW) block.  Small packed params replicated."""
    hw = x_ref.shape[-1]
    inv_hw = 1.0 / hw
    # NOTE: hw == 1 gives std = 0 here; torch.std(ddof=1) would give NaN.
    inv_hwm1 = 1.0 / (hw - 1) if hw > 1 else 0.0

    # ---- unpack packed parameters (static indexing / slicing) --------------
    w1m, w1s = w1_ref[0], w1_ref[1]              # (C, H1)  pre-transposed Dense1
    w2m, w2s = w2_ref[0], w2_ref[1]              # (H1, C)  pre-transposed Dense2
    vh = vh_ref[...]                             # (6, H1)
    b1m, gm, bem = vh[0:1], vh[1:2], vh[2:3]     # (1, H1)
    b1s, gs, bes = vh[3:4], vh[4:5], vh[5:6]
    vc = vc_ref[...]                             # (3, C)
    hist, b2m, b2s = vc[0:1], vc[1:2], vc[2:3]   # (1, C)

    # ---- instance-norm statistics over the spatial lane axis (whole tile) --
    x = x_ref[...].astype(jnp.float32)                          # (Bt, C, HW)
    mean = jnp.sum(x, axis=-1) * inv_hw                         # (Bt, C)
    sq = jnp.sum(jnp.square(x - mean[..., None]), axis=-1)      # (Bt, C)
    std = jnp.sqrt(sq * inv_hwm1)                               # unbiased std

    # ---- tiny MLP branches, batched over the whole tile (one matmul/layer) -
    def mlp(v, w1t, b1, g, be, w2t, b2):
        h = jnp.dot(v, w1t, preferred_element_type=jnp.float32) + b1   # (Bt, H1)
        mu = jnp.mean(h, axis=-1, keepdims=True)
        d = h - mu
        var = jnp.mean(d * d, axis=-1, keepdims=True)
        hn = d * jax.lax.rsqrt(var + LN_EPS) * g + be
        o = jnp.dot(hn, w2t, preferred_element_type=jnp.float32) + b2  # (Bt, C)
        return jax.nn.sigmoid(o) + 0.5

    scale_m = mlp(mean + hist, w1m, b1m, gm, bem, w2m, b2m)     # (Bt, C)
    scale_s = mlp(std + hist, w1s, b1s, gs, bes, w2s, b2s)      # (Bt, C)

    # ---- fused rescale: (x - mean*sm + eps) / (std*ss + eps) = x*inv + shift
    inv = pl.reciprocal(std * scale_s + EPS, approx=False)      # (Bt, C)
    shift = (EPS - mean * scale_m) * inv                        # (Bt, C)
    out_ref[...] = (x * inv[..., None] + shift[..., None]).astype(out_ref.dtype)


# --------------------------------------------------------------------------- #
# Wrapper helpers
# --------------------------------------------------------------------------- #
def _pack_params(params):
    """Pack the 13 small parameters into 4 arrays (fewer tiny DMAs)."""
    pm, ps = params["fc_mean"], params["fc_std"]
    C = pm["w2"].shape[0]
    w1t = jnp.stack([pm["w1"].T, ps["w1"].T], axis=0)           # (2, C, H1)
    w2t = jnp.stack([pm["w2"].T, ps["w2"].T], axis=0)           # (2, H1, C)
    vh = jnp.stack([pm["b1"], pm["g"], pm["be"],
                    ps["b1"], ps["g"], ps["be"]], axis=0)        # (6, H1)
    vc = jnp.stack([params["hist_info"].reshape(C),
                    pm["b2"], ps["b2"]], axis=0)                 # (3, C)
    return w1t, w2t, vh, vc


def _tpu_vmem_info():
    """(scoped-VMEM cap bytes, assume-two-tensorcores) — generation aware."""
    try:
        info = pltpu.get_tpu_info()
        vmem = int(getattr(info, "vmem_capacity_bytes", 0) or 0) or (64 << 20)
    except Exception:
        vmem = 64 << 20                      # conservative (v7x-like) fallback
    cap = max(min(vmem - (8 << 20), 100 << 20), 32 << 20)
    two_cores = vmem <= (64 << 20)           # v7x: 64 MiB/TC and 2 TCs/chip
    return cap, two_cores


def _auto_bt(B, C, HW, itemsize, cap, two_cores, target_bytes=8 << 20):
    """Batch-tile size: big DMAs, fits scoped VMEM, >=2 steps on 2-TC parts."""
    per_b = C * HW * itemsize
    # ~5x block budget: double-buffered in+out blocks plus f32 temporaries.
    bt = max(1, min(target_bytes // per_b, max(cap - (4 << 20), 0) // (5 * per_b)))
    if two_cores and B >= 2:
        bt = min(bt, B // 2)                 # keep both TensorCores busy
    return max(1, min(int(bt), B))


# --------------------------------------------------------------------------- #
# Public entry point
# --------------------------------------------------------------------------- #
def in_mlp_rescaling4(x, params, *, batch_tile=None):
    """x: (B, C, H, W) float32.  params: dict of fc_mean / fc_std / hist_info."""
    B, C, H, W = x.shape
    HW = H * W
    H1 = C // 4

    # No wrapper-side padding: the trailing (C, HW) block dims equal the full
    # array dims (always legal), so the lane tail is masked in-kernel for free.
    x_flat = x.reshape(B, C, HW)

    cap, two_cores = _tpu_vmem_info()
    bt = int(batch_tile) if batch_tile is not None else _auto_bt(
        B, C, HW, x.dtype.itemsize, cap, two_cores)
    bt = max(1, min(bt, B))
    while B % bt:                            # exact tiling: no batch pad/mask
        bt -= 1
    steps = B // bt
    # TODO(synk): add an HW-tiled streaming-stats (sum/sumsq) variant for the
    # case where a single (C, HW) element block no longer fits scoped VMEM.

    w1t, w2t, vh, vc = _pack_params(params)

    def rep(shape):  # replicated (whole-array) spec for the packed params
        nd = len(shape)
        return pl.BlockSpec(shape, lambda b, _nd=nd: (0,) * _nd)

    block_bytes = bt * C * HW * x.dtype.itemsize
    vmem_limit = int(min(max(5 * block_bytes + (4 << 20), 32 << 20), cap))

    out_flat = pl.pallas_call(
        _in_mlp_kernel,
        out_shape=jax.ShapeDtypeStruct((B, C, HW), x.dtype),
        grid_spec=pltpu.PrefetchScalarGridSpec(
            num_scalar_prefetch=0,
            grid=(steps,),
            in_specs=[
                pl.BlockSpec((bt, C, HW), lambda b: (b, 0, 0)),   # x batch tile
                rep((2, C, H1)),                                  # Dense1 weights
                rep((2, H1, C)),                                  # Dense2 weights
                rep((6, H1)),                                     # b1/gamma/beta
                rep((3, C)),                                      # hist, b2m, b2s
            ],
            out_specs=pl.BlockSpec((bt, C, HW), lambda b: (b, 0, 0)),
        ),
        compiler_params=pltpu.CompilerParams(
            dimension_semantics=("parallel",),
            vmem_limit_bytes=vmem_limit,
        ),
    )(x_flat, w1t, w2t, vh, vc)

    return out_flat.reshape(B, C, H, W)


# --------------------------------------------------------------------------- #
# Parameters + pure-JAX reference (for the self-test)
# --------------------------------------------------------------------------- #
def make_params(key, num_features):
    """Deterministic parameter init (shapes follow the module's __init__)."""
    C = num_features
    H1 = C // 4
    ks = jax.random.split(key, 8)

    def branch(k0, k1):
        return {
            "w1": jax.random.normal(k0, (H1, C), jnp.float32) * 0.2,  # Dense(C, C//4)
            "b1": jnp.zeros((H1,), jnp.float32),
            "g": jnp.ones((H1,), jnp.float32),                        # LayerNorm weight
            "be": jnp.zeros((H1,), jnp.float32),                      # LayerNorm bias
            "w2": jax.random.normal(k1, (C, H1), jnp.float32) * 0.2,  # Dense(C//4, C)
            "b2": jnp.zeros((C,), jnp.float32),
        }

    return {
        "fc_mean": branch(ks[0], ks[1]),
        "fc_std": branch(ks[2], ks[3]),
        "hist_info": jax.random.normal(ks[4], (1, C), jnp.float32),   # F.randn([1, C])
    }


def reference_forward(x, params):
    """Pure-JAX reference matching the PyTorch semantics (extra_info=None)."""
    B, C, H, W = x.shape
    mean = x.mean(axis=(2, 3), keepdims=True)
    std = x.std(axis=(2, 3), keepdims=True, ddof=1)

    def mlp(v, p):  # v: (B, C)
        h = v @ p["w1"].T + p["b1"]
        mu = h.mean(-1, keepdims=True)
        var = ((h - mu) ** 2).mean(-1, keepdims=True)
        hn = (h - mu) / jnp.sqrt(var + LN_EPS) * p["g"] + p["be"]
        o = hn @ p["w2"].T + p["b2"]
        return jax.nn.sigmoid(o) + 0.5

    hist = jnp.broadcast_to(params["hist_info"], (B, C))
    sm = mlp(mean.reshape(B, C) + hist, params["fc_mean"]).reshape(B, C, 1, 1)
    ss = mlp(std.reshape(B, C) + hist, params["fc_std"]).reshape(B, C, 1, 1)
    return (x - mean * sm + EPS) / (std * ss + EPS)


if __name__ == "__main__":
    key = jax.random.PRNGKey(0)
    kx, kp, kx2 = jax.random.split(key, 3)

    # Tolerance covers MXU f32 pass-strategy differences between the in-kernel
    # dots and XLA's reference matmuls (sigmoid squashes the discrepancy).
    TOL = 2e-3

    # Case 1: lane-aligned spatial (16x16 -> HW=256), B=2.
    B, C, H, W = 2, 16, 16, 16
    x = jax.random.normal(kx, (B, C, H, W), jnp.float32)
    params = make_params(kp, C)

    out = jax.block_until_ready(in_mlp_rescaling4(x, params))
    ref = reference_forward(x, params)
    assert out.shape == (B, C, H, W)
    err1 = float(jnp.max(jnp.abs(out - ref)))
    assert err1 < TOL, f"case1 max err {err1}"

    # Case 2: non-128-aligned spatial (10x10 -> HW=100) and odd batch (5),
    # handled entirely in-kernel (no wrapper pad / slice).
    B2, H2, W2 = 5, 10, 10
    x2 = jax.random.normal(kx2, (B2, C, H2, W2), jnp.float32)
    out2 = jax.block_until_ready(in_mlp_rescaling4(x2, params))
    ref2 = reference_forward(x2, params)
    err2 = float(jnp.max(jnp.abs(out2 - ref2)))
    assert err2 < TOL, f"case2 max err {err2}"

    # Case 3: force a multi-step grid (batch_tile=1 -> 2 parallel steps).
    out3 = jax.block_until_ready(in_mlp_rescaling4(x, params, batch_tile=1))
    err3 = float(jnp.max(jnp.abs(out3 - ref)))
    assert err3 < TOL, f"case3 max err {err3}"

    print("KERNEL_OK")
</pallas_src>

<mosaic_0001>
module attributes {stable_mosaic.version = 11 : i64} {
  func.func @_in_mlp_kernel(%arg0: i32, %arg1: memref<1x16x256xf32, #tpu.memory_space<vmem>>, %arg2: memref<2x16x4xf32, #tpu.memory_space<vmem>>, %arg3: memref<2x4x16xf32, #tpu.memory_space<vmem>>, %arg4: memref<6x4xf32, #tpu.memory_space<vmem>>, %arg5: memref<3x16xf32, #tpu.memory_space<vmem>>, %arg6: memref<1x16x256xf32, #tpu.memory_space<vmem>>) attributes {dimension_semantics = [#tpu.dimension_semantics<parallel>], iteration_bounds = array<i64: 2>, scalar_prefetch = 0 : i64, scratch_operands = 0 : i64, tpu.core_type = #tpu.core_type<tc>, window_params = [{transform_indices = @transform_0, window_bounds = array<i64: 1, 16, 256>}, {pipeline_mode = #tpu.pipeline_mode<synchronous>, transform_indices = @transform_1, window_bounds = array<i64: 2, 16, 4>}, {pipeline_mode = #tpu.pipeline_mode<synchronous>, transform_indices = @transform_2, window_bounds = array<i64: 2, 4, 16>}, {pipeline_mode = #tpu.pipeline_mode<synchronous>, transform_indices = @transform_3, window_bounds = array<i64: 6, 4>}, {pipeline_mode = #tpu.pipeline_mode<synchronous>, transform_indices = @transform_4, window_bounds = array<i64: 3, 16>}, {transform_indices = @transform_5, window_bounds = array<i64: 1, 16, 256>}]} {
    %c0 = arith.constant 0 : index
    %c0_0 = arith.constant 0 : index
    %c0_1 = arith.constant 0 : index
    %0 = vector.load %arg2[%c0, %c0_0, %c0_1] : memref<2x16x4xf32, #tpu.memory_space<vmem>>, vector<1x16x4xf32>
    %1 = vector.shape_cast %0 : vector<1x16x4xf32> to vector<16x4xf32>
    %c1 = arith.constant 1 : index
    %c0_2 = arith.constant 0 : index
    %c0_3 = arith.constant 0 : index
    %2 = vector.load %arg2[%c1, %c0_2, %c0_3] : memref<2x16x4xf32, #tpu.memory_space<vmem>>, vector<1x16x4xf32>
    %3 = vector.shape_cast %2 : vector<1x16x4xf32> to vector<16x4xf32>
    %c0_4 = arith.constant 0 : index
    %c0_5 = arith.constant 0 : index
    %c0_6 = arith.constant 0 : index
    %4 = vector.load %arg3[%c0_4, %c0_5, %c0_6] : memref<2x4x16xf32, #tpu.memory_space<vmem>>, vector<1x4x16xf32>
    %5 = vector.shape_cast %4 : vector<1x4x16xf32> to vector<4x16xf32>
    %c1_7 = arith.constant 1 : index
    %c0_8 = arith.constant 0 : index
    %c0_9 = arith.constant 0 : index
    %6 = vector.load %arg3[%c1_7, %c0_8, %c0_9] : memref<2x4x16xf32, #tpu.memory_space<vmem>>, vector<1x4x16xf32>
    %7 = vector.shape_cast %6 : vector<1x4x16xf32> to vector<4x16xf32>
    %c0_10 = arith.constant 0 : index
    %c0_11 = arith.constant 0 : index
    %8 = vector.load %arg4[%c0_10, %c0_11] : memref<6x4xf32, #tpu.memory_space<vmem>>, vector<6x4xf32>
    %9 = vector.extract_strided_slice %8 {offsets = [0, 0], sizes = [1, 4], strides = [1, 1]} : vector<6x4xf32> to vector<1x4xf32>
    %10 = vector.extract_strided_slice %8 {offsets = [1, 0], sizes = [1, 4], strides = [1, 1]} : vector<6x4xf32> to vector<1x4xf32>
    %11 = vector.extract_strided_slice %8 {offsets = [2, 0], sizes = [1, 4], strides = [1, 1]} : vector<6x4xf32> to vector<1x4xf32>
    %12 = vector.extract_strided_slice %8 {offsets = [3, 0], sizes = [1, 4], strides = [1, 1]} : vector<6x4xf32> to vector<1x4xf32>
    %13 = vector.extract_strided_slice %8 {offsets = [4, 0], sizes = [1, 4], strides = [1, 1]} : vector<6x4xf32> to vector<1x4xf32>
    %14 = vector.extract_strided_slice %8 {offsets = [5, 0], sizes = [1, 4], strides = [1, 1]} : vector<6x4xf32> to vector<1x4xf32>
    %c0_12 = arith.constant 0 : index
    %c0_13 = arith.constant 0 : index
    %15 = vector.load %arg5[%c0_12, %c0_13] : memref<3x16xf32, #tpu.memory_space<vmem>>, vector<3x16xf32>
    %16 = vector.extract_strided_slice %15 {offsets = [0, 0], sizes = [1, 16], strides = [1, 1]} : vector<3x16xf32> to vector<1x16xf32>
    %17 = vector.extract_strided_slice %15 {offsets = [1, 0], sizes = [1, 16], strides = [1, 1]} : vector<3x16xf32> to vector<1x16xf32>
    %18 = vector.extract_strided_slice %15 {offsets = [2, 0], sizes = [1, 16], strides = [1, 1]} : vector<3x16xf32> to vector<1x16xf32>
    %c0_14 = arith.constant 0 : index
    %c0_15 = arith.constant 0 : index
    %c0_16 = arith.constant 0 : index
    %19 = vector.load %arg1[%c0_14, %c0_15, %c0_16] : memref<1x16x256xf32, #tpu.memory_space<vmem>>, vector<1x16x256xf32>
    %cst = arith.constant dense<0.000000e+00> : vector<1x16xf32>
    %20 = vector.multi_reduction <add>, %19, %cst [2] : vector<1x16x256xf32> to vector<1x16xf32>
    %cst_17 = arith.constant 3.906250e-03 : f32
    %21 = vector.broadcast %cst_17 : f32 to vector<1x16xf32>
    %22 = arith.mulf %20, %21 : vector<1x16xf32>
    %23 = vector.shape_cast %22 : vector<1x16xf32> to vector<1x16x1xf32>
    %24 = vector.broadcast %23 : vector<1x16x1xf32> to vector<1x16x256xf32>
    %25 = arith.subf %19, %24 : vector<1x16x256xf32>
    %26 = arith.mulf %25, %25 : vector<1x16x256xf32>
    %cst_18 = arith.constant dense<0.000000e+00> : vector<1x16xf32>
    %27 = vector.multi_reduction <add>, %26, %cst_18 [2] : vector<1x16x256xf32> to vector<1x16xf32>
    %cst_19 = arith.constant 0.00392156886 : f32
    %28 = vector.broadcast %cst_19 : f32 to vector<1x16xf32>
    %29 = arith.mulf %27, %28 : vector<1x16xf32>
    %30 = math.sqrt %29 : vector<1x16xf32>
    %31 = arith.addf %22, %16 : vector<1x16xf32>
    %cst_20 = arith.constant dense<0.000000e+00> : vector<1x4xf32>
    %32 = tpu.matmul %31, %1, %cst_20 {dimension_numbers = #tpu.dot_dimension_numbers<[1], [0], [0], [1], [0, 0, 1, 1], [], []>} : vector<1x16xf32>, vector<16x4xf32>, vector<1x4xf32> -> vector<1x4xf32>
    %33 = arith.addf %32, %9 : vector<1x4xf32>
    %cst_21 = arith.constant dense<0.000000e+00> : vector<1xf32>
    %34 = vector.multi_reduction <add>, %33, %cst_21 [1] : vector<1x4xf32> to vector<1xf32>
    %35 = vector.shape_cast %34 : vector<1xf32> to vector<1x1xf32>
    %cst_22 = arith.constant 4.000000e+00 : f32
    %36 = vector.broadcast %cst_22 : f32 to vector<1x1xf32>
    %37 = arith.divf %35, %36 : vector<1x1xf32>
    %38 = vector.broadcast %37 : vector<1x1xf32> to vector<1x4xf32>
    %39 = arith.subf %33, %38 : vector<1x4xf32>
    %40 = arith.mulf %39, %39 : vector<1x4xf32>
    %cst_23 = arith.constant dense<0.000000e+00> : vector<1xf32>
    %41 = vector.multi_reduction <add>, %40, %cst_23 [1] : vector<1x4xf32> to vector<1xf32>
    %42 = vector.shape_cast %41 : vector<1xf32> to vector<1x1xf32>
    %cst_24 = arith.constant 4.000000e+00 : f32
    %43 = vector.broadcast %cst_24 : f32 to vector<1x1xf32>
    %44 = arith.divf %42, %43 : vector<1x1xf32>
    %cst_25 = arith.constant 9.99999974E-6 : f32
    %45 = vector.broadcast %cst_25 : f32 to vector<1x1xf32>
    %46 = arith.addf %44, %45 : vector<1x1xf32>
    %47 = math.rsqrt %46 : vector<1x1xf32>
    %48 = vector.broadcast %47 : vector<1x1xf32> to vector<1x4xf32>
    %49 = arith.mulf %39, %48 : vector<1x4xf32>
    %50 = arith.mulf %49, %10 : vector<1x4xf32>
    %51 = arith.addf %50, %11 : vector<1x4xf32>
    %cst_26 = arith.constant dense<0.000000e+00> : vector<1x16xf32>
    %52 = tpu.matmul %51, %5, %cst_26 {dimension_numbers = #tpu.dot_dimension_numbers<[1], [0], [0], [1], [0, 0, 1, 1], [], []>} : vector<1x4xf32>, vector<4x16xf32>, vector<1x16xf32> -> vector<1x16xf32>
    %53 = arith.addf %52, %17 : vector<1x16xf32>
    %54 = arith.negf %53 : vector<1x16xf32>
    %55 = math.exp %54 : vector<1x16xf32>
    %cst_27 = arith.constant 1.000000e+00 : f32
    %56 = vector.broadcast %cst_27 : f32 to vector<1x16xf32>
    %57 = arith.addf %56, %55 : vector<1x16xf32>
    %58 = arith.divf %56, %57 : vector<1x16xf32>
    %cst_28 = arith.constant 5.000000e-01 : f32
    %59 = vector.broadcast %cst_28 : f32 to vector<1x16xf32>
    %60 = arith.addf %58, %59 : vector<1x16xf32>
    %61 = arith.addf %30, %16 : vector<1x16xf32>
    %cst_29 = arith.constant dense<0.000000e+00> : vector<1x4xf32>
    %62 = tpu.matmul %61, %3, %cst_29 {dimension_numbers = #tpu.dot_dimension_numbers<[1], [0], [0], [1], [0, 0, 1, 1], [], []>} : vector<1x16xf32>, vector<16x4xf32>, vector<1x4xf32> -> vector<1x4xf32>
    %63 = arith.addf %62, %12 : vector<1x4xf32>
    %cst_30 = arith.constant dense<0.000000e+00> : vector<1xf32>
    %64 = vector.multi_reduction <add>, %63, %cst_30 [1] : vector<1x4xf32> to vector<1xf32>
    %65 = vector.shape_cast %64 : vector<1xf32> to vector<1x1xf32>
    %cst_31 = arith.constant 4.000000e+00 : f32
    %66 = vector.broadcast %cst_31 : f32 to vector<1x1xf32>
    %67 = arith.divf %65, %66 : vector<1x1xf32>
    %68 = vector.broadcast %67 : vector<1x1xf32> to vector<1x4xf32>
    %69 = arith.subf %63, %68 : vector<1x4xf32>
    %70 = arith.mulf %69, %69 : vector<1x4xf32>
    %cst_32 = arith.constant dense<0.000000e+00> : vector<1xf32>
    %71 = vector.multi_reduction <add>, %70, %cst_32 [1] : vector<1x4xf32> to vector<1xf32>
    %72 = vector.shape_cast %71 : vector<1xf32> to vector<1x1xf32>
    %cst_33 = arith.constant 4.000000e+00 : f32
    %73 = vector.broadcast %cst_33 : f32 to vector<1x1xf32>
    %74 = arith.divf %72, %73 : vector<1x1xf32>
    %cst_34 = arith.constant 9.99999974E-6 : f32
    %75 = vector.broadcast %cst_34 : f32 to vector<1x1xf32>
    %76 = arith.addf %74, %75 : vector<1x1xf32>
    %77 = math.rsqrt %76 : vector<1x1xf32>
    %78 = vector.broadcast %77 : vector<1x1xf32> to vector<1x4xf32>
    %79 = arith.mulf %69, %78 : vector<1x4xf32>
    %80 = arith.mulf %79, %13 : vector<1x4xf32>
    %81 = arith.addf %80, %14 : vector<1x4xf32>
    %cst_35 = arith.constant dense<0.000000e+00> : vector<1x16xf32>
    %82 = tpu.matmul %81, %7, %cst_35 {dimension_numbers = #tpu.dot_dimension_numbers<[1], [0], [0], [1], [0, 0, 1, 1], [], []>} : vector<1x4xf32>, vector<4x16xf32>, vector<1x16xf32> -> vector<1x16xf32>
    %83 = arith.addf %82, %18 : vector<1x16xf32>
    %84 = arith.negf %83 : vector<1x16xf32>
    %85 = math.exp %84 : vector<1x16xf32>
    %cst_36 = arith.constant 1.000000e+00 : f32
    %86 = vector.broadcast %cst_36 : f32 to vector<1x16xf32>
    %87 = arith.addf %86, %85 : vector<1x16xf32>
    %88 = arith.divf %86, %87 : vector<1x16xf32>
    %cst_37 = arith.constant 5.000000e-01 : f32
    %89 = vector.broadcast %cst_37 : f32 to vector<1x16xf32>
    %90 = arith.addf %88, %89 : vector<1x16xf32>
    %91 = arith.mulf %30, %90 : vector<1x16xf32>
    %cst_38 = arith.constant 1.000000e-07 : f32
    %92 = vector.broadcast %cst_38 : f32 to vector<1x16xf32>
    %93 = arith.addf %91, %92 : vector<1x16xf32>
    %94 = tpu.reciprocal %93 : vector<1x16xf32> -> vector<1x16xf32>
    %95 = arith.mulf %22, %60 : vector<1x16xf32>
    %cst_39 = arith.constant 1.000000e-07 : f32
    %96 = vector.broadcast %cst_39 : f32 to vector<1x16xf32>
    %97 = arith.subf %96, %95 : vector<1x16xf32>
    %98 = arith.mulf %97, %94 : vector<1x16xf32>
    %99 = vector.shape_cast %94 : vector<1x16xf32> to vector<1x16x1xf32>
    %100 = vector.broadcast %99 : vector<1x16x1xf32> to vector<1x16x256xf32>
    %101 = arith.mulf %19, %100 : vector<1x16x256xf32>
    %102 = vector.shape_cast %98 : vector<1x16xf32> to vector<1x16x1xf32>
    %103 = vector.broadcast %102 : vector<1x16x1xf32> to vector<1x16x256xf32>
    %104 = arith.addf %101, %103 : vector<1x16x256xf32>
    %c0_40 = arith.constant 0 : index
    %c0_41 = arith.constant 0 : index
    %c0_42 = arith.constant 0 : index
    %105 = vector.load %arg6[%c0_40, %c0_41, %c0_42] : memref<1x16x256xf32, #tpu.memory_space<vmem>>, vector<1x16x256xf32>
    tpu.vector_store %arg6[%c0_40, %c0_41, %c0_42], %104 {strides = array<i32>} : memref<1x16x256xf32, #tpu.memory_space<vmem>>, vector<1x16x256xf32>,
    return
  }
  func.func @transform_0(%arg0: i32) -> (i32, i32, i32) {
    %c0_i32 = arith.constant 0 : i32
    %c0_i32_0 = arith.constant 0 : i32
    %c0_i32_1 = arith.constant 0 : i32
    return %arg0, %c0_i32, %c0_i32_0 : i32, i32, i32
  }
  func.func @transform_1(%arg0: i32) -> (i32, i32, i32) {
    %c0_i32 = arith.constant 0 : i32
    %c0_i32_0 = arith.constant 0 : i32
    %c0_i32_1 = arith.constant 0 : i32
    %c0_i32_2 = arith.constant 0 : i32
    return %c0_i32, %c0_i32_0, %c0_i32_1 : i32, i32, i32
  }
  func.func @transform_2(%arg0: i32) -> (i32, i32, i32) {
    %c0_i32 = arith.constant 0 : i32
    %c0_i32_0 = arith.constant 0 : i32
    %c0_i32_1 = arith.constant 0 : i32
    %c0_i32_2 = arith.constant 0 : i32
    return %c0_i32, %c0_i32_0, %c0_i32_1 : i32, i32, i32
  }
  func.func @transform_3(%arg0: i32) -> (i32, i32) {
    %c0_i32 = arith.constant 0 : i32
    %c0_i32_0 = arith.constant 0 : i32
    %c0_i32_1 = arith.constant 0 : i32
    return %c0_i32, %c0_i32_0 : i32, i32
  }
  func.func @transform_4(%arg0: i32) -> (i32, i32) {
    %c0_i32 = arith.constant 0 : i32
    %c0_i32_0 = arith.constant 0 : i32
    %c0_i32_1 = arith.constant 0 : i32
    return %c0_i32, %c0_i32_0 : i32, i32
  }
  func.func @transform_5(%arg0: i32) -> (i32, i32, i32) {
    %c0_i32 = arith.constant 0 : i32
    %c0_i32_0 = arith.constant 0 : i32
    %c0_i32_1 = arith.constant 0 : i32
    return %arg0, %c0_i32, %c0_i32_0 : i32, i32, i32
  }
}

</mosaic_0001>

<llo_original>
// kernel: tpu_custom_call.1
$region0: #{tpu_custom_call.1}
  #allocation0 [shape = 'u32[]', space=smem, size = 0x4, offset = 0x4, fixed_abs, tag = 'smem constant byte address 0x4 - core index']
  #allocation1 [shape = 'u32[144,128]{1,0:T(1,128)}', space=vmem, size = 0x12000, scoped, tag = 'internal scratch']
  %s0 = inlined_call_operand.hbm [shape: f32[2,16,256], index: 0, kind: input, shape index: {}]
  %s1 = inlined_call_operand.vmem [shape: f32[2,16,4], index: 1, kind: input, shape index: {}]
  %s2 = inlined_call_operand.vmem [shape: f32[2,4,16], index: 2, kind: input, shape index: {}]
  %s3 = inlined_call_operand.vmem [shape: f32[6,4], index: 3, kind: input, shape index: {}]
  %s4 = inlined_call_operand.vmem [shape: f32[3,16], index: 4, kind: input, shape index: {}]
  %s5 = inlined_call_operand.hbm [shape: f32[2,16,256], index: 5, kind: output, shape index: {}]
  %s6 = sld [smem:[#allocation0]]
  $region57: #{tpu_custom_call.1} parent=0
    _
  %s8 = ssub.s32 1, %s6
  %s9 = scalar_select 0, %s8, %s6
  $region1: #{tpu_custom_call.1} parent=0
    #allocation2 [shape = 'u8[32768]{0}', space=vmem, size = 0x8000, scoped, tag = 'input window, operand 0']
    #allocation3 [shape = 's32[2]{0}', space=sflag, size = 0x8, scoped, tag = 'scoped memory for tpu_custom_call.1']
    #allocation4 [shape = 's32[2]{0}', space=sflag, size = 0x8, scoped, tag = 'scoped memory for tpu_custom_call.1']
    #allocation5 [shape = 'u8[32768]{0}', space=vmem, size = 0x8000, scoped, tag = 'output window, operand 0']
    %10 = vsyncpa [#allocation3], 0
    %s11 = scalar_lea.sflag [#allocation3], 1
    %12 = vsyncpa %s11, 0
    %13 = vsyncpa [#allocation4], 0
    %s14 = scalar_lea.sflag [#allocation4], 1
    %15 = vsyncpa %s14, 0
    loop: start=0, step=1, limit=4
    $region2: #{tpu_custom_call.1} parent=1 // loop_pre_header
      _
    $region3: #{tpu_custom_call.1} parent=1 // loop_header
      %s17 = sphi 0, %s21
      %p18 = scmp.ge.s32.totalorder %s17, 4
      %s27 = sphi 0, %s29
      %s30 = sphi 0, %s27
      %s31 = sphi 0, %s30
      %s47 = sphi 0, %s31
      %s51 = sphi 0, %s51
      %s53 = sphi 0, %s51
      %s54 = sphi 0, %s53
      %s68 = sphi 0, %s54
      %s72 = sphi 0, %s72
      %s74 = sphi 0, %s72
      %s75 = sphi 0, %s74
      %s89 = sphi 0, %s75
      %s93 = sphi 0, %s93
      %s95 = sphi 0, %s93
      %s96 = sphi 0, %s95
      %s110 = sphi 0, %s96
      %s114 = sphi 0, %s114
      %s116 = sphi 0, %s114
      %s117 = sphi 0, %s116
      %s131 = sphi 0, %s117
      %s137 = sphi 0, %s139
      %s140 = sphi 0, %s137
      %s141 = sphi 0, %s140
      %s157 = sphi 0, %s141
    $region4: #{tpu_custom_call.1} parent=1 // loop_header_branch
      %20 = sbr.rel (%p18) target = $region8
    $region5: #{tpu_custom_call.1} parent=1 // loop_body
      %s22 = ssub.s32 %s17, 1
      %s23 = ssub.s32 %s17, 2
      %s24 = sadd.s32 %s17, 1
      %s25 = ssub.s32 %s17, %s24
      %p26 = scmp.eq.s32.totalorder %s25, 0
      %s28 = sadd.s32 %s27, 1
      %s29 = scalar_select %p26, %s27, %s28
      %p32 = pneg %p26
      %p33 = scmp.eq.s32.totalorder %s17, 1
      %p34 = por %p32, %p33
      %p35 = scmp.ne.s32.totalorder %s27, %s30
      %p36 = scmp.eq.s32.totalorder %s17, 0
      %p37 = por %p35, %p36
      %p38 = scmp.ne.s32.totalorder %s27, %s30
      %p39 = scmp.eq.s32.totalorder %s22, 1
      %p40 = por %p38, %p39
      %p41 = scmp.ne.s32.totalorder %s30, %s31
      %p42 = scmp.eq.s32.totalorder %s22, 0
      %p43 = por %p41, %p42
      %p44 = scmp.ne.s32.totalorder %s30, %s31
      %p45 = scmp.eq.s32.totalorder %s23, 1
      %p46 = por %p44, %p45
      %p48 = scmp.ne.s32.totalorder %s31, %s47
      %p49 = scmp.eq.s32.totalorder %s23, 0
      %p50 = por %p48, %p49
      %s52 = sadd.s32 %s51, 1
      %p55 = scmp.eq.s32.totalorder %s17, 1
      %p56 = scmp.ne.s32.totalorder %s51, %s53
      %p57 = scmp.eq.s32.totalorder %s17, 0
      %p58 = por %p56, %p57
      %p59 = scmp.ne.s32.totalorder %s51, %s53
      %p60 = scmp.eq.s32.totalorder %s22, 1
      %p61 = por %p59, %p60
      %p62 = scmp.ne.s32.totalorder %s53, %s54
      %p63 = scmp.eq.s32.totalorder %s22, 0
      %p64 = por %p62, %p63
      %p65 = scmp.ne.s32.totalorder %s53, %s54
      %p66 = scmp.eq.s32.totalorder %s23, 1
      %p67 = por %p65, %p66
      %p69 = scmp.ne.s32.totalorder %s54, %s68
      %p70 = scmp.eq.s32.totalorder %s23, 0
      %p71 = por %p69, %p70
      %s73 = sadd.s32 %s72, 1
      %p76 = scmp.eq.s32.totalorder %s17, 1
      %p77 = scmp.ne.s32.totalorder %s72, %s74
      %p78 = scmp.eq.s32.totalorder %s17, 0
      %p79 = por %p77, %p78
      %p80 = scmp.ne.s32.totalorder %s72, %s74
      %p81 = scmp.eq.s32.totalorder %s22, 1
      %p82 = por %p80, %p81
      %p83 = scmp.ne.s32.totalorder %s74, %s75
      %p84 = scmp.eq.s32.totalorder %s22, 0
      %p85 = por %p83, %p84
      %p86 = scmp.ne.s32.totalorder %s74, %s75
      %p87 = scmp.eq.s32.totalorder %s23, 1
      %p88 = por %p86, %p87
      %p90 = scmp.ne.s32.totalorder %s75, %s89
      %p91 = scmp.eq.s32.totalorder %s23, 0
      %p92 = por %p90, %p91
      %s94 = sadd.s32 %s93, 1
      %p97 = scmp.eq.s32.totalorder %s17, 1
      %p98 = scmp.ne.s32.totalorder %s93, %s95
      %p99 = scmp.eq.s32.totalorder %s17, 0
      %p100 = por %p98, %p99
      %p101 = scmp.ne.s32.totalorder %s93, %s95
      %p102 = scmp.eq.s32.totalorder %s22, 1
      %p103 = por %p101, %p102
      %p104 = scmp.ne.s32.totalorder %s95, %s96
      %p105 = scmp.eq.s32.totalorder %s22, 0
      %p106 = por %p104, %p105
      %p107 = scmp.ne.s32.totalorder %s95, %s96
      %p108 = scmp.eq.s32.totalorder %s23, 1
      %p109 = por %p107, %p108
      %p111 = scmp.ne.s32.totalorder %s96, %s110
      %p112 = scmp.eq.s32.totalorder %s23, 0
      %p113 = por %p111, %p112
      %s115 = sadd.s32 %s114, 1
      %p118 = scmp.eq.s32.totalorder %s17, 1
      %p119 = scmp.ne.s32.totalorder %s114, %s116
      %p120 = scmp.eq.s32.totalorder %s17, 0
      %p121 = por %p119, %p120
      %p122 = scmp.ne.s32.totalorder %s114, %s116
      %p123 = scmp.eq.s32.totalorder %s22, 1
      %p124 = por %p122, %p123
      %p125 = scmp.ne.s32.totalorder %s116, %s117
      %p126 = scmp.eq.s32.totalorder %s22, 0
      %p127 = por %p125, %p126
      %p128 = scmp.ne.s32.totalorder %s116, %s117
      %p129 = scmp.eq.s32.totalorder %s23, 1
      %p130 = por %p128, %p129
      %p132 = scmp.ne.s32.totalorder %s117, %s131
      %p133 = scmp.eq.s32.totalorder %s23, 0
      %p134 = por %p132, %p133
      %s135 = ssub.s32 %s17, %s24
      %p136 = scmp.eq.s32.totalorder %s135, 0
      %s138 = sadd.s32 %s137, 1
      %s139 = scalar_select %p136, %s137, %s138
      %p142 = pneg %p136
      %p143 = scmp.eq.s32.totalorder %s17, 1
      %p144 = por %p142, %p143
      %p145 = scmp.ne.s32.totalorder %s137, %s140
      %p146 = scmp.eq.s32.totalorder %s17, 0
      %p147 = por %p145, %p146
      %p148 = scmp.ne.s32.totalorder %s137, %s140
      %p149 = scmp.eq.s32.totalorder %s22, 1
      %p150 = por %p148, %p149
      %p151 = scmp.ne.s32.totalorder %s140, %s141
      %p152 = scmp.eq.s32.totalorder %s22, 0
      %p153 = por %p151, %p152
      %p154 = scmp.ne.s32.totalorder %s140, %s141
      %p155 = scmp.eq.s32.totalorder %s23, 1
      %p156 = por %p154, %p155
      %p158 = scmp.ne.s32.totalorder %s141, %s157
      %p159 = scmp.eq.s32.totalorder %s23, 0
      %p160 = por %p158, %p159
      %p161 = scmp.le.s32.totalorder 1, %s17
      %p162 = scmp.lt.s32.totalorder %s17, 3
      %p163 = pnand %p161, %p162
      %p164 = pneg %p163
      // Predicated region
      $region9: #{tpu_custom_call.1} parent=5 // pred_check
        _
      $region10: #{tpu_custom_call.1} parent=5 // pred_check_branch
        %166 = sbr.rel (%p163) target = $region12
      $region11: #{tpu_custom_call.1} parent=5 // pred_region
        %s167 = ssub.s32 %s17, 1
        // Predicated region
        $region13: #{tpu_custom_call.1} parent=11 // pred_check
          %p168 = pneg %p64
        $region14: #{tpu_custom_call.1} parent=11 // pred_check_branch
          %170 = sbr.rel (%p168) target = $region16
        $region15: #{tpu_custom_call.1} parent=11 // pred_region
          _
        $region16: #{tpu_custom_call.1} parent=11 // pred_fallthru
          _
        // Predicated region
        $region17: #{tpu_custom_call.1} parent=11 // pred_check
          %p171 = pneg %p85
        $region18: #{tpu_custom_call.1} parent=11 // pred_check_branch
          %173 = sbr.rel (%p171) target = $region20
        $region19: #{tpu_custom_call.1} parent=11 // pred_region
          _
        $region20: #{tpu_custom_call.1} parent=11 // pred_fallthru
          _
        // Predicated region
        $region21: #{tpu_custom_call.1} parent=11 // pred_check
          %p174 = pneg %p106
        $region22: #{tpu_custom_call.1} parent=11 // pred_check_branch
          %176 = sbr.rel (%p174) target = $region24
        $region23: #{tpu_custom_call.1} parent=11 // pred_region
          _
        $region24: #{tpu_custom_call.1} parent=11 // pred_fallthru
          _
        // Predicated region
        $region25: #{tpu_custom_call.1} parent=11 // pred_check
          %p177 = pneg %p127
        $region26: #{tpu_custom_call.1} parent=11 // pred_check_branch
          %179 = sbr.rel (%p177) target = $region28
        $region27: #{tpu_custom_call.1} parent=11 // pred_region
          _
        $region28: #{tpu_custom_call.1} parent=11 // pred_fallthru
          _
      $region12: #{tpu_custom_call.1} parent=5 // pred_fallthru
        _
      %p180 = scmp.lt.s32.totalorder %s17, 2
      // Predicated region
      $region29: #{tpu_custom_call.1} parent=5 // pred_check
        %p181 = pneg %p180
      $region30: #{tpu_custom_call.1} parent=5 // pred_check_branch
        %183 = sbr.rel (%p181) target = $region32
      $region31: #{tpu_custom_call.1} parent=5 // pred_region
        // Predicated region
        $region33: #{tpu_custom_call.1} parent=31 // pred_check
          %p184 = pneg %p37
        $region34: #{tpu_custom_call.1} parent=31 // pred_check_branch
          %186 = sbr.rel (%p184) target = $region36
        $region35: #{tpu_custom_call.1} parent=31 // pred_region
          %s187 = sand.u32 %s27, 1
          %s188 = scalar_lea.sflag [#allocation3], %s187
          %s189 = sand.u32 %s27, 1
          %s190 = smul.addr %s189, 32
          %s191 = scalar_lea.vmem [#allocation2], %s190
          %s193 = ssub.s32 512, 512
          %194 = vsyncadd %s188, %s193
          %s195 = smul.addr %s17, 4
          %s196 = smul.addr %s195, 128
          %s197 = scalar_lea.hbm %s0, %s196
          %s198 = sshll.u32 %s191, 4
          %s199 = int_to_ptr.vmem [resolvable:$true] %s198
          %204 = dma.hbm_to_vmem [thread:$0]  %s197, 512, %s199, %s188, 256, 256, 16
        $region36: #{tpu_custom_call.1} parent=31 // pred_fallthru
          _
      $region32: #{tpu_custom_call.1} parent=5 // pred_fallthru
        _
      %p205 = scmp.le.s32.totalorder 1, %s17
      %p206 = scmp.lt.s32.totalorder %s17, 3
      %p207 = pnand %p205, %p206
      %p208 = pneg %p207
      // Predicated region
      $region37: #{tpu_custom_call.1} parent=5 // pred_check
        _
      $region38: #{tpu_custom_call.1} parent=5 // pred_check_branch
        %210 = sbr.rel (%p207) target = $region40
      $region39: #{tpu_custom_call.1} parent=5 // pred_region
        %s211 = ssub.s32 %s17, 1
        %s212 = sand.u32 %s30, 1
        %s213 = scalar_lea.sflag [#allocation3], %s212
        %s214 = sand.u32 %s30, 1
        %s215 = smul.addr %s214, 32
        %s216 = scalar_lea.vmem [#allocation2], %s215
        // Predicated region
        $region41: #{tpu_custom_call.1} parent=39 // pred_check
          %p217 = pneg %p43
        $region42: #{tpu_custom_call.1} parent=39 // pred_check_branch
          %219 = sbr.rel (%p217) target = $region44
        $region43: #{tpu_custom_call.1} parent=39 // pred_region
          %220 = dma.done %s213, 512
        $region44: #{tpu_custom_call.1} parent=39 // pred_fallthru
          _
        %s221 = sand.u32 %s30, 1
        %s222 = scalar_lea.sflag [#allocation3], %s221
        %s223 = sand.u32 %s30, 1
        %s224 = smul.addr %s223, 32
        %s225 = scalar_lea.vmem [#allocation2], %s224
        %p226 = pneg %p43
        %p227 = pneg %p40
        %p228 = pneg %p64
        %p229 = pneg %p61
        %p230 = pneg %p85
        %p231 = pneg %p82
        %p232 = pneg %p106
        %p233 = pneg %p103
        %p234 = pneg %p127
        %p235 = pneg %p124
        %p236 = pneg %p153
        %p237 = pneg %p150
        %s238 = sand.u32 %s140, 1
        %s239 = scalar_lea.sflag [#allocation4], %s238
        %s240 = sand.u32 %s140, 1
        %s241 = smul.addr %s240, 32
        %s242 = scalar_lea.vmem [#allocation5], %s241
        %v243 = vld [vmem:[%s1] sm:$0xff]
        %v244 = vld [vmem:[%s1 + $0x8] sm:$0xff]
        %s245 = scalar_lea.vmem %s1, 16
        %v246 = vld [vmem:[%s245] sm:$0xff]
        %v247 = vld [vmem:[%s245 + $0x8] sm:$0xff]
        %v248 = vld [vmem:[%s2] sm:$0xf]
        %s249 = scalar_lea.vmem %s2, 4
        %v250 = vld [vmem:[%s249] sm:$0xf]
        %v251 = vld [vmem:[%s3] sm:$0x3f]
        %v252 = vld [vmem:[%s4] sm:$0x7]
        %v253 = vld [vmem:[%s216] sm:$0xff]
        %v254 = vld [vmem:[%s216 + $0x8] sm:$0xff]
        %v255 = vld [vmem:[%s216 + $0x10] sm:$0xff]
        %v256 = vld [vmem:[%s216 + $0x18] sm:$0xff]
        %v257 = vadd.f32 %v253, %v254
        %258 = vadd.xlane.f32.xlu0 %v257
        %v259 = vpop.xlane.xlu0 %258
        %v260 = vadd.f32 %v255, %v256
        %261 = vadd.xlane.f32.xlu0 %v260
        %v262 = vpop.xlane.xlu0 %261
        %v263 = vmul.f32 %v259, 0.00390625
        %v264 = vmul.f32 %v262, 0.00390625
        %v265 = vsub.f32 %v253, %v263
        %v266 = vsub.f32 %v254, %v263
        %v267 = vsub.f32 %v255, %v264
        %v268 = vsub.f32 %v256, %v264
        %v269 = vmul.f32 %v265, %v265
        %v270 = vmul.f32 %v266, %v266
        %v271 = vmul.f32 %v267, %v267
        %v272 = vmul.f32 %v268, %v268
        %v273 = vadd.f32 %v269, %v270
        %274 = vadd.xlane.f32.xlu0 %v273
        %v275 = vpop.xlane.xlu0 %274
        %v276 = vadd.f32 %v271, %v272
        %277 = vadd.xlane.f32.xlu0 %v276
        %v278 = vpop.xlane.xlu0 %277
        %v279 = vmul.f32 %v275, 0.003921569
        %v280 = vmul.f32 %v278, 0.003921569
        %v281 = vrsqrt.pop %v279
        %v282 = vmul.f32 %v279, %v281
        %vm283 = vcmp.eq.f32.partialorder %v279, inf
        %v284 = vsel %vm283, %v279, %v282
        %vm285 = vcmp.eq.f32.partialorder %v279, 0.0
        %v286 = vand.u32 %v279, 2147483648
        %v287 = vsel %vm285, %v286, %v284
        %v288 = vrsqrt.pop %v280
        %v289 = vmul.f32 %v280, %v288
        %vm290 = vcmp.eq.f32.partialorder %v280, inf
        %v291 = vsel %vm290, %v280, %v289
        %vm292 = vcmp.eq.f32.partialorder %v280, 0.0
        %v293 = vand.u32 %v280, 2147483648
        %v294 = vsel %vm292, %v293, %v291
        %v296 = vlaneseq
        %v297 = vshrl.u32 %v296, 7
        %v298 = vsub.s32 0, %v297
        %v299 = vrot.slane %v252, %v298
        %301 = vbcast.lane.b32.xlu0 %v299, 256
        %v302 = vpop.permute.xlu0 %301
        %s304 = sor.u32 256, 8
        %305 = vbcast.lane.b32.xlu0 %v299, %s304
        %v306 = vpop.permute.xlu0 %305
        %v309 = vadd.f32 %v263, %v302
        %v310 = vadd.f32 %v264, %v306
        %313 = vset.pattern.permute.xlu0 0
        %314 = vperm.xlu0 %313, %v309
        %v315 = vpop.permute.xlu0 %314
        %316 = vset.pattern.permute.xlu0 0
        %317 = vperm.xlu0 %316, %v310
        %v318 = vpop.permute.xlu0 %317
        %v319 = vlaneseq
        %v320 = vand.u32 %v319, 127
        %v321 = vlaneseq
        %v322 = vshrl.u32 %v321, 7
        %v323 = vsub.s32 %v320, %v322
        %v324 = vrot.slane %v315, %v323
        %v325 = vadd.s32 %v320, 4294967288
        %v326 = vlaneseq
        %v327 = vshrl.u32 %v326, 7
        %v328 = vsub.s32 %v325, %v327
        %v329 = vrot.slane %v318, %v328
        %vm330 = vcmask 130112
        %v331 = vsel %vm330, %v329, %v324
        %vm332 = vcmask 130048
        %v333 = vsel %vm332, %v331, 0
        %335 = vmatprep.subr.mxu0 0.0
        %336 = vmatpush1.msra.mxu0 0.0
        %337 = vmatprep.subr.mxu0 0.0
        %338 = vmatpush1.msra.mxu0 0.0
        %339 = vmatprep.subr.mxu0 0.0
        %340 = vmatpush1.msra.mxu0 0.0
        %341 = vmatprep.subr.mxu0 0.0
        %342 = vmatpush1.msra.mxu0 0.0
        %343 = vmatprep.subr.mxu0 0.0
        %344 = vmatpush1.msra.mxu0 0.0
        %345 = vmatprep.subr.mxu0 0.0
        %346 = vmatpush1.msra.mxu0 0.0
        %347 = vmatprep.subr.mxu0 0.0
        %348 = vmatpush1.msra.mxu0 0.0
        %349 = vmatprep.subr.mxu0 0.0
        %350 = vmatpush1.msra.mxu0 0.0
        %351 = vmatprep.subr.mxu0 0.0
        %352 = vmatpush1.msra.mxu0 0.0
        %353 = vmatprep.subr.mxu0 0.0
        %354 = vmatpush1.msra.mxu0 0.0
        %355 = vmatprep.subr.mxu0 0.0
        %356 = vmatpush1.msra.mxu0 0.0
        %357 = vmatprep.subr.mxu0 0.0
        %358 = vmatpush1.msra.mxu0 0.0
        %359 = vmatprep.subr.mxu0 0.0
        %360 = vmatpush1.msra.mxu0 0.0
        %361 = vmatprep.subr.mxu0 0.0
        %362 = vmatpush1.msra.mxu0 0.0
        %363 = vmatprep.subr.mxu0 0.0
        %364 = vmatpush1.msra.mxu0 %v244
        %365 = vmatprep.subr.mxu0 0.0
        %366 = vmatpush1.msra.mxu0 %v243
        %367 = vmatprep.subr.mxu0 0.0
        %368 = vmatpush2.msra.mxu0 0.0
        %369 = vmatprep.subr.mxu0 0.0
        %370 = vmatpush2.msra.mxu0 0.0
        %371 = vmatprep.subr.mxu0 0.0
        %372 = vmatpush2.msra.mxu0 0.0
        %373 = vmatprep.subr.mxu0 0.0
        %374 = vmatpush2.msra.mxu0 0.0
        %375 = vmatprep.subr.mxu0 0.0
        %376 = vmatpush2.msra.mxu0 0.0
        %377 = vmatprep.subr.mxu0 0.0
        %378 = vmatpush2.msra.mxu0 0.0
        %379 = vmatprep.subr.mxu0 0.0
        %380 = vmatpush2.msra.mxu0 0.0
        %381 = vmatprep.subr.mxu0 0.0
        %382 = vmatpush2.msra.mxu0 0.0
        %383 = vmatprep.subr.mxu0 0.0
        %384 = vmatpush2.msra.mxu0 0.0
        %385 = vmatprep.subr.mxu0 0.0
        %386 = vmatpush2.msra.mxu0 0.0
        %387 = vmatprep.subr.mxu0 0.0
        %388 = vmatpush2.msra.mxu0 0.0
        %389 = vmatprep.subr.mxu0 0.0
        %390 = vmatpush2.msra.mxu0 0.0
        %391 = vmatprep.subr.mxu0 0.0
        %392 = vmatpush2.msra.mxu0 0.0
        %393 = vmatprep.subr.mxu0 0.0
        %394 = vmatpush2.msra.mxu0 0.0
        %395 = vmatprep.subr.mxu0 0.0
        %396 = vmatpush2.msra.mxu0 0.0
        %397 = vmatprep.subr.mxu0 0.0
        %398 = vmatpush2.msra.mxu0 0.0
        %399 = vmatprep.mubr.f32.mxu0 0.0
        %400 = vmatmul.mubr.f32.gmra.mxu0 %v333
        %v401 = vpop.f32.mrf.mxu0
        %v402 = vadd.f32 %v251, %v401
        %v403 = vpop.f32.mrf.mxu0
        %404 = vdwg.mxu0
        %vm405 = vcmask 24576
        %v406 = vsel %vm405, %v402, 0.0
        %407 = vadd.xlane.f32.xlu0 %v406
        %v408 = vpop.xlane.xlu0 %407
        %v409 = vrcp.pop 4.0
        %v410 = vmul.f32 %v408, %v409
        %v411 = vsub.f32 %v402, %v410
        %v412 = vmul.f32 %v411, %v411
        %v413 = vsel %vm405, %v412, 0.0
        %414 = vadd.xlane.f32.xlu0 %v413
        %v415 = vpop.xlane.xlu0 %414
        %v416 = vmul.f32 %v415, %v409
        %v417 = vadd.f32 %v416, 1e-05
        %v418 = vrsqrt.pop %v417
        %v419 = vmul.f32 %v411, %v418
        %v421 = vrot.slane %v251, 1
        %v423 = vmul.f32 %v419, %v421
        %v424 = vrot.slane %v251, 2
        %v426 = vadd.f32 %v423, %v424
        %v427 = vrot.slane %v252, 1
        %vm429 = vcmask 31744
        %v431 = vsel %vm429, %v426, 0
        %vm433 = vcmask 1043456
        %v435 = vsel %vm433, %v248, 0
        %437 = vmatprep.subr.mxu0 0.0
        %438 = vmatpush1.msra.mxu0 0.0
        %439 = vmatprep.subr.mxu0 0.0
        %440 = vmatpush1.msra.mxu0 0.0
        %441 = vmatprep.subr.mxu0 0.0
        %442 = vmatpush1.msra.mxu0 0.0
        %443 = vmatprep.subr.mxu0 0.0
        %444 = vmatpush1.msra.mxu0 0.0
        %445 = vmatprep.subr.mxu0 0.0
        %446 = vmatpush1.msra.mxu0 0.0
        %447 = vmatprep.subr.mxu0 0.0
        %448 = vmatpush1.msra.mxu0 0.0
        %449 = vmatprep.subr.mxu0 0.0
        %450 = vmatpush1.msra.mxu0 0.0
        %451 = vmatprep.subr.mxu0 0.0
        %452 = vmatpush1.msra.mxu0 0.0
        %453 = vmatprep.subr.mxu0 0.0
        %454 = vmatpush1.msra.mxu0 0.0
        %455 = vmatprep.subr.mxu0 0.0
        %456 = vmatpush1.msra.mxu0 0.0
        %457 = vmatprep.subr.mxu0 0.0
        %458 = vmatpush1.msra.mxu0 0.0
        %459 = vmatprep.subr.mxu0 0.0
        %460 = vmatpush1.msra.mxu0 0.0
        %461 = vmatprep.subr.mxu0 0.0
        %462 = vmatpush1.msra.mxu0 0.0
        %463 = vmatprep.subr.mxu0 0.0
        %464 = vmatpush1.msra.mxu0 0.0
        %465 = vmatprep.subr.mxu0 0.0
        %466 = vmatpush1.msra.mxu0 0.0
        %467 = vmatprep.subr.mxu0 0.0
        %468 = vmatpush1.msra.mxu0 %v435
        %469 = vmatprep.subr.mxu0 0.0
        %470 = vmatpush2.msra.mxu0 0.0
        %471 = vmatprep.subr.mxu0 0.0
        %472 = vmatpush2.msra.mxu0 0.0
        %473 = vmatprep.subr.mxu0 0.0
        %474 = vmatpush2.msra.mxu0 0.0
        %475 = vmatprep.subr.mxu0 0.0
        %476 = vmatpush2.msra.mxu0 0.0
        %477 = vmatprep.subr.mxu0 0.0
        %478 = vmatpush2.msra.mxu0 0.0
        %479 = vmatprep.subr.mxu0 0.0
        %480 = vmatpush2.msra.mxu0 0.0
        %481 = vmatprep.subr.mxu0 0.0
        %482 = vmatpush2.msra.mxu0 0.0
        %483 = vmatprep.subr.mxu0 0.0
        %484 = vmatpush2.msra.mxu0 0.0
        %485 = vmatprep.subr.mxu0 0.0
        %486 = vmatpush2.msra.mxu0 0.0
        %487 = vmatprep.subr.mxu0 0.0
        %488 = vmatpush2.msra.mxu0 0.0
        %489 = vmatprep.subr.mxu0 0.0
        %490 = vmatpush2.msra.mxu0 0.0
        %491 = vmatprep.subr.mxu0 0.0
        %492 = vmatpush2.msra.mxu0 0.0
        %493 = vmatprep.subr.mxu0 0.0
        %494 = vmatpush2.msra.mxu0 0.0
        %495 = vmatprep.subr.mxu0 0.0
        %496 = vmatpush2.msra.mxu0 0.0
        %497 = vmatprep.subr.mxu0 0.0
        %498 = vmatpush2.msra.mxu0 0.0
        %499 = vmatprep.subr.mxu0 0.0
        %500 = vmatpush2.msra.mxu0 0.0
        %501 = vmatprep.mubr.f32.mxu0 0.0
        %502 = vmatmul.mubr.f32.gmra.mxu0 %v431
        %v503 = vpop.f32.mrf.mxu0
        %v504 = vadd.f32 %v427, %v503
        %v505 = vpop.f32.mrf.mxu0
        %506 = vdwg.mxu0
        %v507 = vxor.u32 %v504, 2147483648
        %v508 = vmul.f32 %v507, 1.442695
        %v509 = vpow.pop %v508
        %v510 = vadd.f32 %v509, 1.0
        %v511 = vrcp.pop %v510
        %v512 = vmul.f32 1.0, %v511
        %v513 = vadd.f32 %v512, 0.5
        %v514 = vadd.f32 %v287, %v302
        %v515 = vadd.f32 %v294, %v306
        %518 = vset.pattern.permute.xlu0 0
        %519 = vperm.xlu0 %518, %v514
        %v520 = vpop.permute.xlu0 %519
        %521 = vset.pattern.permute.xlu0 0
        %522 = vperm.xlu0 %521, %v515
        %v523 = vpop.permute.xlu0 %522
        %v524 = vlaneseq
        %v525 = vshrl.u32 %v524, 7
        %v526 = vsub.s32 %v320, %v525
        %v527 = vrot.slane %v520, %v526
        %v528 = vlaneseq
        %v529 = vshrl.u32 %v528, 7
        %v530 = vsub.s32 %v325, %v529
        %v531 = vrot.slane %v523, %v530
        %v532 = vsel %vm330, %v531, %v527
        %v533 = vrot.slane %v251, 3
        %v535 = vsel %vm332, %v532, 0
        %537 = vmatprep.subr.mxu0 0.0
        %538 = vmatpush1.msra.mxu0 0.0
        %539 = vmatprep.subr.mxu0 0.0
        %540 = vmatpush1.msra.mxu0 0.0
        %541 = vmatprep.subr.mxu0 0.0
        %542 = vmatpush1.msra.mxu0 0.0
        %543 = vmatprep.subr.mxu0 0.0
        %544 = vmatpush1.msra.mxu0 0.0
        %545 = vmatprep.subr.mxu0 0.0
        %546 = vmatpush1.msra.mxu0 0.0
        %547 = vmatprep.subr.mxu0 0.0
        %548 = vmatpush1.msra.mxu0 0.0
        %549 = vmatprep.subr.mxu0 0.0
        %550 = vmatpush1.msra.mxu0 0.0
        %551 = vmatprep.subr.mxu0 0.0
        %552 = vmatpush1.msra.mxu0 0.0
        %553 = vmatprep.subr.mxu0 0.0
        %554 = vmatpush1.msra.mxu0 0.0
        %555 = vmatprep.subr.mxu0 0.0
        %556 = vmatpush1.msra.mxu0 0.0
        %557 = vmatprep.subr.mxu0 0.0
        %558 = vmatpush1.msra.mxu0 0.0
        %559 = vmatprep.subr.mxu0 0.0
        %560 = vmatpush1.msra.mxu0 0.0
        %561 = vmatprep.subr.mxu0 0.0
        %562 = vmatpush1.msra.mxu0 0.0
        %563 = vmatprep.subr.mxu0 0.0
        %564 = vmatpush1.msra.mxu0 0.0
        %565 = vmatprep.subr.mxu0 0.0
        %566 = vmatpush1.msra.mxu0 %v247
        %567 = vmatprep.subr.mxu0 0.0
        %568 = vmatpush1.msra.mxu0 %v246
        %569 = vmatprep.subr.mxu0 0.0
        %570 = vmatpush2.msra.mxu0 0.0
        %571 = vmatprep.subr.mxu0 0.0
        %572 = vmatpush2.msra.mxu0 0.0
        %573 = vmatprep.subr.mxu0 0.0
        %574 = vmatpush2.msra.mxu0 0.0
        %575 = vmatprep.subr.mxu0 0.0
        %576 = vmatpush2.msra.mxu0 0.0
        %577 = vmatprep.subr.mxu0 0.0
        %578 = vmatpush2.msra.mxu0 0.0
        %579 = vmatprep.subr.mxu0 0.0
        %580 = vmatpush2.msra.mxu0 0.0
        %581 = vmatprep.subr.mxu0 0.0
        %582 = vmatpush2.msra.mxu0 0.0
        %583 = vmatprep.subr.mxu0 0.0
        %584 = vmatpush2.msra.mxu0 0.0
        %585 = vmatprep.subr.mxu0 0.0
        %586 = vmatpush2.msra.mxu0 0.0
        %587 = vmatprep.subr.mxu0 0.0
        %588 = vmatpush2.msra.mxu0 0.0
        %589 = vmatprep.subr.mxu0 0.0
        %590 = vmatpush2.msra.mxu0 0.0
        %591 = vmatprep.subr.mxu0 0.0
        %592 = vmatpush2.msra.mxu0 0.0
        %593 = vmatprep.subr.mxu0 0.0
        %594 = vmatpush2.msra.mxu0 0.0
        %595 = vmatprep.subr.mxu0 0.0
        %596 = vmatpush2.msra.mxu0 0.0
        %597 = vmatprep.subr.mxu0 0.0
        %598 = vmatpush2.msra.mxu0 0.0
        %599 = vmatprep.subr.mxu0 0.0
        %600 = vmatpush2.msra.mxu0 0.0
        %601 = vmatprep.mubr.f32.mxu0 0.0
        %602 = vmatmul.mubr.f32.gmra.mxu0 %v535
        %v603 = vpop.f32.mrf.mxu0
        %v604 = vadd.f32 %v533, %v603
        %v605 = vpop.f32.mrf.mxu0
        %606 = vdwg.mxu0
        %v607 = vsel %vm405, %v604, 0.0
        %608 = vadd.xlane.f32.xlu0 %v607
        %v609 = vpop.xlane.xlu0 %608
        %v610 = vmul.f32 %v609, %v409
        %v611 = vsub.f32 %v604, %v610
        %v612 = vmul.f32 %v611, %v611
        %v613 = vsel %vm405, %v612, 0.0
        %614 = vadd.xlane.f32.xlu0 %v613
        %v615 = vpop.xlane.xlu0 %614
        %v616 = vmul.f32 %v615, %v409
        %v617 = vadd.f32 %v616, 1e-05
        %v618 = vrsqrt.pop %v617
        %v619 = vmul.f32 %v611, %v618
        %v620 = vrot.slane %v251, 4
        %v622 = vmul.f32 %v619, %v620
        %v623 = vrot.slane %v251, 5
        %v625 = vadd.f32 %v622, %v623
        %v626 = vrot.slane %v252, 2
        %v629 = vsel %vm429, %v625, 0
        %v632 = vsel %vm433, %v250, 0
        %634 = vmatprep.subr.mxu0 0.0
        %635 = vmatpush1.msra.mxu0 0.0
        %636 = vmatprep.subr.mxu0 0.0
        %637 = vmatpush1.msra.mxu0 0.0
        %638 = vmatprep.subr.mxu0 0.0
        %639 = vmatpush1.msra.mxu0 0.0
        %640 = vmatprep.subr.mxu0 0.0
        %641 = vmatpush1.msra.mxu0 0.0
        %642 = vmatprep.subr.mxu0 0.0
        %643 = vmatpush1.msra.mxu0 0.0
        %644 = vmatprep.subr.mxu0 0.0
        %645 = vmatpush1.msra.mxu0 0.0
        %646 = vmatprep.subr.mxu0 0.0
        %647 = vmatpush1.msra.mxu0 0.0
        %648 = vmatprep.subr.mxu0 0.0
        %649 = vmatpush1.msra.mxu0 0.0
        %650 = vmatprep.subr.mxu0 0.0
        %651 = vmatpush1.msra.mxu0 0.0
        %652 = vmatprep.subr.mxu0 0.0
        %653 = vmatpush1.msra.mxu0 0.0
        %654 = vmatprep.subr.mxu0 0.0
        %655 = vmatpush1.msra.mxu0 0.0
        %656 = vmatprep.subr.mxu0 0.0
        %657 = vmatpush1.msra.mxu0 0.0
        %658 = vmatprep.subr.mxu0 0.0
        %659 = vmatpush1.msra.mxu0 0.0
        %660 = vmatprep.subr.mxu0 0.0
        %661 = vmatpush1.msra.mxu0 0.0
        %662 = vmatprep.subr.mxu0 0.0
        %663 = vmatpush1.msra.mxu0 0.0
        %664 = vmatprep.subr.mxu0 0.0
        %665 = vmatpush1.msra.mxu0 %v632
        %666 = vmatprep.subr.mxu0 0.0
        %667 = vmatpush2.msra.mxu0 0.0
        %668 = vmatprep.subr.mxu0 0.0
        %669 = vmatpush2.msra.mxu0 0.0
        %670 = vmatprep.subr.mxu0 0.0
        %671 = vmatpush2.msra.mxu0 0.0
        %672 = vmatprep.subr.mxu0 0.0
        %673 = vmatpush2.msra.mxu0 0.0
        %674 = vmatprep.subr.mxu0 0.0
        %675 = vmatpush2.msra.mxu0 0.0
        %676 = vmatprep.subr.mxu0 0.0
        %677 = vmatpush2.msra.mxu0 0.0
        %678 = vmatprep.subr.mxu0 0.0
        %679 = vmatpush2.msra.mxu0 0.0
        %680 = vmatprep.subr.mxu0 0.0
        %681 = vmatpush2.msra.mxu0 0.0
        %682 = vmatprep.subr.mxu0 0.0
        %683 = vmatpush2.msra.mxu0 0.0
        %684 = vmatprep.subr.mxu0 0.0
        %685 = vmatpush2.msra.mxu0 0.0
        %686 = vmatprep.subr.mxu0 0.0
        %687 = vmatpush2.msra.mxu0 0.0
        %688 = vmatprep.subr.mxu0 0.0
        %689 = vmatpush2.msra.mxu0 0.0
        %690 = vmatprep.subr.mxu0 0.0
        %691 = vmatpush2.msra.mxu0 0.0
        %692 = vmatprep.subr.mxu0 0.0
        %693 = vmatpush2.msra.mxu0 0.0
        %694 = vmatprep.subr.mxu0 0.0
        %695 = vmatpush2.msra.mxu0 0.0
        %696 = vmatprep.subr.mxu0 0.0
        %697 = vmatpush2.msra.mxu0 0.0
        %698 = vmatprep.mubr.f32.mxu0 0.0
        %699 = vmatmul.mubr.f32.gmra.mxu0 %v629
        %v700 = vpop.f32.mrf.mxu0
        %v701 = vadd.f32 %v626, %v700
        %v702 = vpop.f32.mrf.mxu0
        %703 = vdwg.mxu0
        %v704 = vxor.u32 %v701, 2147483648
        %v705 = vmul.f32 %v704, 1.442695
        %v706 = vpow.pop %v705
        %v707 = vadd.f32 %v706, 1.0
        %v708 = vrcp.pop %v707
        %v709 = vmul.f32 1.0, %v708
        %v710 = vadd.f32 %v709, 0.5
        %v712 = vlaneseq
        %v713 = vshrl.u32 %v712, 7
        %v714 = vsub.s32 0, %v713
        %v715 = vrot.slane %v710, %v714
        %717 = vbcast.lane.b32.xlu0 %v715, 256
        %v718 = vpop.permute.xlu0 %717
        %s720 = sor.u32 256, 8
        %721 = vbcast.lane.b32.xlu0 %v715, %s720
        %v722 = vpop.permute.xlu0 %721
        %v725 = vmul.f32 %v287, %v718
        %v726 = vmul.f32 %v294, %v722
        %v727 = vadd.f32 %v725, 1e-07
        %v728 = vadd.f32 %v726, 1e-07
        %v729 = vrcp.pop %v727
        %v730 = vrcp.pop %v728
        %v732 = vlaneseq
        %v733 = vshrl.u32 %v732, 7
        %v734 = vsub.s32 0, %v733
        %v735 = vrot.slane %v513, %v734
        %737 = vbcast.lane.b32.xlu0 %v735, 256
        %v738 = vpop.permute.xlu0 %737
        %s740 = sor.u32 256, 8
        %741 = vbcast.lane.b32.xlu0 %v735, %s740
        %v742 = vpop.permute.xlu0 %741
        %v745 = vmul.f32 %v263, %v738
        %v746 = vmul.f32 %v264, %v742
        %v747 = vsub.f32 1e-07, %v745
        %v748 = vsub.f32 1e-07, %v746
        %v749 = vmul.f32 %v747, %v729
        %v750 = vmul.f32 %v748, %v730
        %752 = vset.pattern.permute.xlu0 0
        %753 = vperm.xlu0 %752, %v729
        %v754 = vpop.permute.xlu0 %753
        %757 = vset.pattern.permute.xlu0 0
        %758 = vperm.xlu0 %757, %v730
        %v759 = vpop.permute.xlu0 %758
        %v761 = vmul.f32 %v253, %v754
        %v762 = vmul.f32 %v254, %v754
        %v763 = vmul.f32 %v255, %v759
        %v764 = vmul.f32 %v256, %v759
        %766 = vset.pattern.permute.xlu0 0
        %767 = vperm.xlu0 %766, %v749
        %v768 = vpop.permute.xlu0 %767
        %771 = vset.pattern.permute.xlu0 0
        %772 = vperm.xlu0 %771, %v750
        %v773 = vpop.permute.xlu0 %772
        %v775 = vadd.f32 %v761, %v768
        %v776 = vadd.f32 %v762, %v768
        %v777 = vadd.f32 %v763, %v773
        %v778 = vadd.f32 %v764, %v773
        %779 = vst [vmem:[%s242] sm:$0xff] %v775
        %780 = vst [vmem:[%s242 + $0x8] sm:$0xff] %v776
        %781 = vst [vmem:[%s242 + $0x10] sm:$0xff] %v777
        %782 = vst [vmem:[%s242 + $0x18] sm:$0xff] %v778
        %s783 = sand.u32 %s140, 1
        %s784 = scalar_lea.sflag [#allocation4], %s783
        %s785 = sand.u32 %s140, 1
        %s786 = smul.addr %s785, 32
        %s787 = scalar_lea.vmem [#allocation5], %s786
        // Predicated region
        $region45: #{tpu_custom_call.1} parent=39 // pred_check
          %p788 = pneg %p150
        $region46: #{tpu_custom_call.1} parent=39 // pred_check_branch
          %790 = sbr.rel (%p788) target = $region48
        $region47: #{tpu_custom_call.1} parent=39 // pred_region
          %s792 = ssub.s32 512, 512
          %793 = vsyncadd %s784, %s792
          %s794 = smul.addr %s22, 4
          %s795 = smul.addr %s794, 128
          %s796 = scalar_lea.hbm %s5, %s795
          %s797 = sshll.u32 %s787, 4
          %s798 = int_to_ptr.vmem [resolvable:$true] %s797
          %803 = dma.vmem_to_hbm [thread:$0]  %s798, 512, %s796, %s784, 256, 256, 16
        $region48: #{tpu_custom_call.1} parent=39 // pred_fallthru
          _
      $region40: #{tpu_custom_call.1} parent=5 // pred_fallthru
        _
      %p804 = scmp.le.s32.totalorder 2, %s17
      // Predicated region
      $region49: #{tpu_custom_call.1} parent=5 // pred_check
        %p805 = pneg %p804
      $region50: #{tpu_custom_call.1} parent=5 // pred_check_branch
        %807 = sbr.rel (%p805) target = $region52
      $region51: #{tpu_custom_call.1} parent=5 // pred_region
        %s808 = ssub.s32 %s17, 2
        // Predicated region
        $region53: #{tpu_custom_call.1} parent=51 // pred_check
          %p809 = pneg %p156
        $region54: #{tpu_custom_call.1} parent=51 // pred_check_branch
          %811 = sbr.rel (%p809) target = $region56
        $region55: #{tpu_custom_call.1} parent=51 // pred_region
          %s812 = sand.u32 %s141, 1
          %s813 = scalar_lea.sflag [#allocation4], %s812
          %s814 = sand.u32 %s141, 1
          %s815 = smul.addr %s814, 32
          %s816 = scalar_lea.vmem [#allocation5], %s815
          %817 = dma.done %s813, 512
        $region56: #{tpu_custom_call.1} parent=51 // pred_fallthru
          _
      $region52: #{tpu_custom_call.1} parent=5 // pred_fallthru
        _
    $region6: #{tpu_custom_call.1} parent=1 // loop_footer
      %s21 = sadd.s32 1, %s17
    $region7: #{tpu_custom_call.1} parent=1 // loop_footer_branch
      %16 = sbr.rel target = $region3
    $region8: #{tpu_custom_call.1} parent=1 // loop_exit
      _
    %818 = vsyncpa [#allocation3], 1
    %s819 = scalar_lea.sflag [#allocation3], 1
    %820 = vsyncpa %s819, 1
    %821 = vsyncpa [#allocation4], 1
    %s822 = scalar_lea.sflag [#allocation4], 1
    %823 = vsyncpa %s822, 1

</llo_original>
